<compile_context>
chip_gen: v7x
topology: tpu7x:2x2x1
jax: 0.10.0
libtpu: 0.0.40
codegen_flags: <defaults>
</compile_context>

<pallas_src>
import jax
import jax.numpy as jnp
from jax.experimental import pallas as pl
from jax.experimental.pallas import tpu as pltpu


def _round_up(x, m):
    return (x + m - 1) // m * m


def _vq_kernel(x_ref, cbt_ref, hn_ref, idx_ref):
    # x_ref:   (TILE_N, Dp)        flattened input rows (one pixel per row)
    # cbt_ref: (Dp, Kp)            codebook, pre-transposed for the MXU
    # hn_ref:  (1, Kp) float32     0.5 * ||c_k||^2 (padded rows = +huge)
    # idx_ref: (TILE_N/128, 128)   int32 nearest-codebook indices (lane-dense)
    dots = jnp.dot(x_ref[...], cbt_ref[...],
                   preferred_element_type=jnp.float32)        # (TILE_N, Kp) on MXU
    # argmin_k ||x - c_k||^2 == argmin_k (0.5*||c_k||^2 - x.c_k)
    score = hn_ref[...] - dots                                 # (TILE_N, Kp)
    idx = jnp.argmin(score, axis=-1).astype(jnp.int32)         # (TILE_N,)
    idx_ref[...] = idx.reshape(idx_ref.shape)


def vq_indices(z_flat, codebook, *, tile_n=1024):
    """z_flat: (N, D) float, codebook: (K, D) float -> (N,) int32 indices."""
    N, D = z_flat.shape
    K, D2 = codebook.shape
    assert D == D2

    # Pad lane dims to multiples of 128 (zero padding is argmin-neutral).
    Dp = _round_up(D, 128)
    Kp = _round_up(K, 128)

    # Row tile: keep the (TILE_N/128, 128) output block (8,128)-aligned.
    tile_n = max(128, int(tile_n))
    if N <= tile_n:
        tile_n = _round_up(N, 128)          # single grid step, block == full array
    else:
        tile_n = _round_up(tile_n, 1024)    # 8*128-row output blocks when tiled
    Np = _round_up(N, tile_n)

    f32 = jnp.float32
    z_p = jnp.zeros((Np, Dp), z_flat.dtype).at[:N, :D].set(z_flat)
    cb_p = jnp.zeros((Kp, Dp), codebook.dtype).at[:K, :D].set(codebook)
    cb_t = cb_p.T                                               # (Dp, Kp)

    # Precompute 0.5*||c_k||^2 once; padded rows get +huge so they never win.
    half_norms = 0.5 * jnp.sum(codebook.astype(f32) ** 2, axis=1)
    half_norms = jnp.full((Kp,), 1e30, f32).at[:K].set(half_norms).reshape(1, Kp)

    grid = (Np // tile_n,)
    out_rows = Np // 128

    # Explicit VMEM budget (inputs are double-buffered by the pipeline).
    vmem_bytes = (2 * tile_n * Dp * z_p.dtype.itemsize          # x tiles
                  + 2 * Dp * Kp * cb_t.dtype.itemsize            # codebook
                  + 2 * Kp * 4                                    # half norms
                  + 2 * (tile_n // 128) * 128 * 4                 # output tiles
                  + 2 * tile_n * Kp * 4)                          # dots/score temps
    vmem_limit = int(min(max(2 * vmem_bytes, 32 * 1024 * 1024), 64 * 1024 * 1024))

    idx2d = pl.pallas_call(
        _vq_kernel,
        out_shape=jax.ShapeDtypeStruct((out_rows, 128), jnp.int32),
        grid_spec=pltpu.PrefetchScalarGridSpec(
            num_scalar_prefetch=0,
            grid=grid,
            in_specs=[
                pl.BlockSpec((tile_n, Dp), lambda i: (i, 0)),
                pl.BlockSpec((Dp, Kp), lambda i: (0, 0)),
                pl.BlockSpec((1, Kp), lambda i: (0, 0)),
            ],
            out_specs=pl.BlockSpec((tile_n // 128, 128), lambda i: (i, 0)),
        ),
        compiler_params=pltpu.CompilerParams(
            dimension_semantics=("parallel",),
            vmem_limit_bytes=vmem_limit),
        cost_estimate=pl.CostEstimate(
            flops=2 * Np * Kp * Dp,
            transcendentals=0,
            bytes_accessed=(Np * Dp * z_p.dtype.itemsize
                            + Dp * Kp * cb_t.dtype.itemsize
                            + Kp * 4 + Np * 4)),
    )(z_p, cb_t, half_norms)

    return idx2d.reshape(Np)[:N]


class VQEmbedding:
    """JAX/Pallas port of the PyTorch VQEmbedding module (forward pass)."""

    def __init__(self, K, D, key):
        # nn.Embedding(K, D) with uniform_(-1/K, 1/K) init
        self.K = K
        self.D = D
        self.weight = jax.random.uniform(
            key, (K, D), dtype=jnp.float32, minval=-1.0 / K, maxval=1.0 / K)

    def forward(self, z_e_x):
        # z_e_x: (B, C=D, H, W)  (NCHW, like PyTorch)
        B, C, H, W = z_e_x.shape
        assert C == self.D
        z_nhwc = jnp.transpose(z_e_x, (0, 2, 3, 1))            # (B, H, W, D)
        z_flat = z_nhwc.reshape(-1, self.D)                     # (N, D)
        indices = vq_indices(z_flat, self.weight)               # (N,) int32
        latents = indices.reshape(B, H, W)                      # (B, H, W)
        return latents

    # TODO(synk): straight_through() (vq_st + codebook-row gather) not
    # implemented; only forward() was requested.


def _reference_distances(z_e_x, weight):
    B, C, H, W = z_e_x.shape
    z = jnp.transpose(z_e_x, (0, 2, 3, 1)).reshape(-1, C).astype(jnp.float32)
    w = weight.astype(jnp.float32)
    return (jnp.sum(z * z, axis=1, keepdims=True)
            + jnp.sum(w * w, axis=1)[None, :]
            - 2.0 * z @ w.T)                                    # (N, K)


if __name__ == "__main__":
    key = jax.random.PRNGKey(0)
    k_emb, k_x = jax.random.split(key)

    K, D = 64, 32
    B, H, W = 2, 16, 16

    module = VQEmbedding(K, D, k_emb)
    z_e_x = jax.random.normal(k_x, (B, D, H, W), dtype=jnp.float32)

    latents = module.forward(z_e_x)
    latents = jax.block_until_ready(latents)

    assert latents.shape == (B, H, W)
    assert latents.dtype == jnp.int32
    assert bool(jnp.all((latents >= 0) & (latents < K)))

    # Correctness: each chosen codeword must be (within fp tolerance) at least
    # as close as the reference argmin's codeword (robust to exact ties).
    d = _reference_distances(z_e_x, module.weight)
    ref_idx = jnp.argmin(d, axis=1)
    got_idx = latents.reshape(-1)
    rows = jnp.arange(d.shape[0])
    assert bool(jnp.all(d[rows, got_idx] <= d[rows, ref_idx] + 1e-4))

    print("KERNEL_OK")
</pallas_src>

<mosaic_0001>
module attributes {stable_mosaic.version = 11 : i64} {
  func.func @_vq_kernel(%arg0: i32, %arg1: memref<512x128xf32, #tpu.memory_space<vmem>>, %arg2: memref<128x128xf32, #tpu.memory_space<vmem>>, %arg3: memref<1x128xf32, #tpu.memory_space<vmem>>, %arg4: memref<4x128xi32, #tpu.memory_space<vmem>>) attributes {dimension_semantics = [#tpu.dimension_semantics<parallel>], iteration_bounds = array<i64: 1>, scalar_prefetch = 0 : i64, scratch_operands = 0 : i64, tpu.core_type = #tpu.core_type<tc>, window_params = [{transform_indices = @transform_0, window_bounds = array<i64: 512, 128>}, {pipeline_mode = #tpu.pipeline_mode<synchronous>, transform_indices = @transform_1, window_bounds = array<i64: 128, 128>}, {pipeline_mode = #tpu.pipeline_mode<synchronous>, transform_indices = @transform_2, window_bounds = array<i64: 1, 128>}, {transform_indices = @transform_3, window_bounds = array<i64: 4, 128>}]} {
    %c0 = arith.constant 0 : index
    %c0_0 = arith.constant 0 : index
    %0 = vector.load %arg1[%c0, %c0_0] : memref<512x128xf32, #tpu.memory_space<vmem>>, vector<512x128xf32>
    %c0_1 = arith.constant 0 : index
    %c0_2 = arith.constant 0 : index
    %1 = vector.load %arg2[%c0_1, %c0_2] : memref<128x128xf32, #tpu.memory_space<vmem>>, vector<128x128xf32>
    %cst = arith.constant dense<0.000000e+00> : vector<512x128xf32>
    %2 = tpu.matmul %0, %1, %cst {dimension_numbers = #tpu.dot_dimension_numbers<[1], [0], [0], [1], [0, 0, 1, 1], [], []>} : vector<512x128xf32>, vector<128x128xf32>, vector<512x128xf32> -> vector<512x128xf32>
    %c0_3 = arith.constant 0 : index
    %c0_4 = arith.constant 0 : index
    %3 = vector.load %arg3[%c0_3, %c0_4] : memref<1x128xf32, #tpu.memory_space<vmem>>, vector<1x128xf32>
    %4 = vector.broadcast %3 : vector<1x128xf32> to vector<512x128xf32>
    %5 = arith.subf %4, %2 : vector<512x128xf32>
    %6 = tpu.reduce_index %5 {axis = 1 : i32, kind = #tpu.reduction_kind<arg_min>} : vector<512x128xf32> -> vector<512xi32>
    %7 = vector.shape_cast %6 : vector<512xi32> to vector<4x128xi32>
    %c0_5 = arith.constant 0 : index
    %c0_6 = arith.constant 0 : index
    %8 = vector.load %arg4[%c0_5, %c0_6] : memref<4x128xi32, #tpu.memory_space<vmem>>, vector<4x128xi32>
    tpu.vector_store %arg4[%c0_5, %c0_6], %7 {strides = array<i32>} : memref<4x128xi32, #tpu.memory_space<vmem>>, vector<4x128xi32>,
    return
  }
  func.func @transform_0(%arg0: i32) -> (i32, i32) {
    %c0_i32 = arith.constant 0 : i32
    %c0_i32_0 = arith.constant 0 : i32
    return %arg0, %c0_i32 : i32, i32
  }
  func.func @transform_1(%arg0: i32) -> (i32, i32) {
    %c0_i32 = arith.constant 0 : i32
    %c0_i32_0 = arith.constant 0 : i32
    %c0_i32_1 = arith.constant 0 : i32
    return %c0_i32, %c0_i32_0 : i32, i32
  }
  func.func @transform_2(%arg0: i32) -> (i32, i32) {
    %c0_i32 = arith.constant 0 : i32
    %c0_i32_0 = arith.constant 0 : i32
    %c0_i32_1 = arith.constant 0 : i32
    return %c0_i32, %c0_i32_0 : i32, i32
  }
  func.func @transform_3(%arg0: i32) -> (i32, i32) {
    %c0_i32 = arith.constant 0 : i32
    %c0_i32_0 = arith.constant 0 : i32
    return %arg0, %c0_i32 : i32, i32
  }
}

</mosaic_0001>

<llo_original>
// kernel: tpu_custom_call.1
$region0: #{tpu_custom_call.1}
  #allocation0 [shape = 'u32[]', space=smem, size = 0x4, offset = 0x4, fixed_abs, tag = 'smem constant byte address 0x4 - core index']
  #allocation1 [shape = 'u32[144,128]{1,0:T(1,128)}', space=vmem, size = 0x12000, scoped, tag = 'internal scratch']
  %s0 = inlined_call_operand.hbm [shape: f32[512,128], index: 0, kind: input, shape index: {}]
  %s1 = inlined_call_operand.hbm [shape: f32[128,128], index: 1, kind: input, shape index: {}]
  %s2 = inlined_call_operand.vmem [shape: f32[1,128], index: 2, kind: input, shape index: {}]
  %s3 = inlined_call_operand.hbm [shape: s32[4,128], index: 3, kind: output, shape index: {}]
  %s4 = sld [smem:[#allocation0]]
  $region30: #{tpu_custom_call.1} parent=0
    _
  %s6 = ssub.s32 1, %s4
  %s7 = scalar_select 0, %s6, %s4
  $region1: #{tpu_custom_call.1} parent=0
    #allocation2 [shape = 'u8[262144]{0}', space=vmem, size = 0x40000, scoped, tag = 'input window, operand 0, single buffered']
    #allocation3 [shape = 's32[1]{0}', space=sflag, size = 0x4, scoped, tag = 'scoped memory for tpu_custom_call.1']
    #allocation4 [shape = 's32[1]{0}', space=sflag, size = 0x4, scoped, tag = 'scoped memory for tpu_custom_call.1']
    #allocation5 [shape = 'u8[65536]{0}', space=vmem, size = 0x10000, scoped, tag = 'input window, operand 1, single buffered']
    #allocation6 [shape = 's32[1]{0}', space=sflag, size = 0x4, scoped, tag = 'scoped memory for tpu_custom_call.1']
    #allocation7 [shape = 'u8[2048]{0}', space=vmem, size = 0x800, scoped, tag = 'output window, operand 0, single buffered']
    %8 = vsyncpa [#allocation3], 0
    %9 = vsyncpa [#allocation6], 0
    %10 = vsyncpa [#allocation4], 0
    // Predicated region
    $region2: #{tpu_custom_call.1} parent=1 // pred_check
      _
    $region3: #{tpu_custom_call.1} parent=1 // pred_check_branch
      %12 = sbr.rel (0) target = $region5
    $region4: #{tpu_custom_call.1} parent=1 // pred_region
      %s14 = ssub.s32 8192, 8192
      %15 = vsyncadd [#allocation3], %s14
      %s16 = sshll.u32 [#allocation2], 4
      %s17 = int_to_ptr.vmem [resolvable:$true] %s16
      %22 = dma.hbm_to_vmem [thread:$0]  %s0, 8192, %s17, [#allocation3], 128, 128, 8
    $region5: #{tpu_custom_call.1} parent=1 // pred_fallthru
      _
    // Predicated region
    $region6: #{tpu_custom_call.1} parent=1 // pred_check
      _
    $region7: #{tpu_custom_call.1} parent=1 // pred_check_branch
      %24 = sbr.rel (0) target = $region9
    $region8: #{tpu_custom_call.1} parent=1 // pred_region
      %s26 = ssub.s32 2048, 2048
      %27 = vsyncadd [#allocation6], %s26
      %s28 = sshll.u32 [#allocation5], 4
      %s29 = int_to_ptr.vmem [resolvable:$true] %s28
      %34 = dma.hbm_to_vmem [thread:$0]  %s1, 2048, %s29, [#allocation6], 128, 128, 8
    $region9: #{tpu_custom_call.1} parent=1 // pred_fallthru
      _
    // Predicated region
    $region10: #{tpu_custom_call.1} parent=1 // pred_check
      _
    $region11: #{tpu_custom_call.1} parent=1 // pred_check_branch
      %36 = sbr.rel (0) target = $region13
    $region12: #{tpu_custom_call.1} parent=1 // pred_region
      _
    $region13: #{tpu_custom_call.1} parent=1 // pred_fallthru
      _
    // Predicated region
    $region14: #{tpu_custom_call.1} parent=1 // pred_check
      _
    $region15: #{tpu_custom_call.1} parent=1 // pred_check_branch
      %38 = sbr.rel (0) target = $region17
    $region16: #{tpu_custom_call.1} parent=1 // pred_region
      %39 = dma.done [#allocation3], 8192
    $region17: #{tpu_custom_call.1} parent=1 // pred_fallthru
      _
    // Predicated region
    $region18: #{tpu_custom_call.1} parent=1 // pred_check
      _
    $region19: #{tpu_custom_call.1} parent=1 // pred_check_branch
      %41 = sbr.rel (0) target = $region21
    $region20: #{tpu_custom_call.1} parent=1 // pred_region
      %42 = dma.done [#allocation6], 2048
    $region21: #{tpu_custom_call.1} parent=1 // pred_fallthru
      _
    %v43 = vld [vmem:[#allocation2] sm:$0xff]
    %v44 = vld [vmem:[#allocation2 + $0x8] sm:$0xff]
    %v45 = vld [vmem:[#allocation2 + $0x10] sm:$0xff]
    %v46 = vld [vmem:[#allocation2 + $0x18] sm:$0xff]
    %v47 = vld [vmem:[#allocation2 + $0x20] sm:$0xff]
    %v48 = vld [vmem:[#allocation2 + $0x28] sm:$0xff]
    %v49 = vld [vmem:[#allocation2 + $0x30] sm:$0xff]
    %v50 = vld [vmem:[#allocation2 + $0x38] sm:$0xff]
    %v51 = vld [vmem:[#allocation2 + $0x40] sm:$0xff]
    %v52 = vld [vmem:[#allocation2 + $0x48] sm:$0xff]
    %v53 = vld [vmem:[#allocation2 + $0x50] sm:$0xff]
    %v54 = vld [vmem:[#allocation2 + $0x58] sm:$0xff]
    %v55 = vld [vmem:[#allocation2 + $0x60] sm:$0xff]
    %v56 = vld [vmem:[#allocation2 + $0x68] sm:$0xff]
    %v57 = vld [vmem:[#allocation2 + $0x70] sm:$0xff]
    %v58 = vld [vmem:[#allocation2 + $0x78] sm:$0xff]
    %v59 = vld [vmem:[#allocation2 + $0x80] sm:$0xff]
    %v60 = vld [vmem:[#allocation2 + $0x88] sm:$0xff]
    %v61 = vld [vmem:[#allocation2 + $0x90] sm:$0xff]
    %v62 = vld [vmem:[#allocation2 + $0x98] sm:$0xff]
    %v63 = vld [vmem:[#allocation2 + $0xa0] sm:$0xff]
    %v64 = vld [vmem:[#allocation2 + $0xa8] sm:$0xff]
    %v65 = vld [vmem:[#allocation2 + $0xb0] sm:$0xff]
    %v66 = vld [vmem:[#allocation2 + $0xb8] sm:$0xff]
    %v67 = vld [vmem:[#allocation2 + $0xc0] sm:$0xff]
    %v68 = vld [vmem:[#allocation2 + $0xc8] sm:$0xff]
    %v69 = vld [vmem:[#allocation2 + $0xd0] sm:$0xff]
    %v70 = vld [vmem:[#allocation2 + $0xd8] sm:$0xff]
    %v71 = vld [vmem:[#allocation2 + $0xe0] sm:$0xff]
    %v72 = vld [vmem:[#allocation2 + $0xe8] sm:$0xff]
    %v73 = vld [vmem:[#allocation2 + $0xf0] sm:$0xff]
    %v74 = vld [vmem:[#allocation2 + $0xf8] sm:$0xff]
    %v75 = vld [vmem:[#allocation2 + $0x100] sm:$0xff]
    %v76 = vld [vmem:[#allocation2 + $0x108] sm:$0xff]
    %v77 = vld [vmem:[#allocation2 + $0x110] sm:$0xff]
    %v78 = vld [vmem:[#allocation2 + $0x118] sm:$0xff]
    %v79 = vld [vmem:[#allocation2 + $0x120] sm:$0xff]
    %v80 = vld [vmem:[#allocation2 + $0x128] sm:$0xff]
    %v81 = vld [vmem:[#allocation2 + $0x130] sm:$0xff]
    %v82 = vld [vmem:[#allocation2 + $0x138] sm:$0xff]
    %v83 = vld [vmem:[#allocation2 + $0x140] sm:$0xff]
    %v84 = vld [vmem:[#allocation2 + $0x148] sm:$0xff]
    %v85 = vld [vmem:[#allocation2 + $0x150] sm:$0xff]
    %v86 = vld [vmem:[#allocation2 + $0x158] sm:$0xff]
    %v87 = vld [vmem:[#allocation2 + $0x160] sm:$0xff]
    %v88 = vld [vmem:[#allocation2 + $0x168] sm:$0xff]
    %v89 = vld [vmem:[#allocation2 + $0x170] sm:$0xff]
    %v90 = vld [vmem:[#allocation2 + $0x178] sm:$0xff]
    %v91 = vld [vmem:[#allocation2 + $0x180] sm:$0xff]
    %v92 = vld [vmem:[#allocation2 + $0x188] sm:$0xff]
    %v93 = vld [vmem:[#allocation2 + $0x190] sm:$0xff]
    %v94 = vld [vmem:[#allocation2 + $0x198] sm:$0xff]
    %v95 = vld [vmem:[#allocation2 + $0x1a0] sm:$0xff]
    %v96 = vld [vmem:[#allocation2 + $0x1a8] sm:$0xff]
    %v97 = vld [vmem:[#allocation2 + $0x1b0] sm:$0xff]
    %v98 = vld [vmem:[#allocation2 + $0x1b8] sm:$0xff]
    %v99 = vld [vmem:[#allocation2 + $0x1c0] sm:$0xff]
    %v100 = vld [vmem:[#allocation2 + $0x1c8] sm:$0xff]
    %v101 = vld [vmem:[#allocation2 + $0x1d0] sm:$0xff]
    %v102 = vld [vmem:[#allocation2 + $0x1d8] sm:$0xff]
    %v103 = vld [vmem:[#allocation2 + $0x1e0] sm:$0xff]
    %v104 = vld [vmem:[#allocation2 + $0x1e8] sm:$0xff]
    %v105 = vld [vmem:[#allocation2 + $0x1f0] sm:$0xff]
    %v106 = vld [vmem:[#allocation2 + $0x1f8] sm:$0xff]
    %v107 = vld [vmem:[#allocation5] sm:$0xff]
    %v108 = vld [vmem:[#allocation5 + $0x8] sm:$0xff]
    %v109 = vld [vmem:[#allocation5 + $0x10] sm:$0xff]
    %v110 = vld [vmem:[#allocation5 + $0x18] sm:$0xff]
    %v111 = vld [vmem:[#allocation5 + $0x20] sm:$0xff]
    %v112 = vld [vmem:[#allocation5 + $0x28] sm:$0xff]
    %v113 = vld [vmem:[#allocation5 + $0x30] sm:$0xff]
    %v114 = vld [vmem:[#allocation5 + $0x38] sm:$0xff]
    %v115 = vld [vmem:[#allocation5 + $0x40] sm:$0xff]
    %v116 = vld [vmem:[#allocation5 + $0x48] sm:$0xff]
    %v117 = vld [vmem:[#allocation5 + $0x50] sm:$0xff]
    %v118 = vld [vmem:[#allocation5 + $0x58] sm:$0xff]
    %v119 = vld [vmem:[#allocation5 + $0x60] sm:$0xff]
    %v120 = vld [vmem:[#allocation5 + $0x68] sm:$0xff]
    %v121 = vld [vmem:[#allocation5 + $0x70] sm:$0xff]
    %v122 = vld [vmem:[#allocation5 + $0x78] sm:$0xff]
    %123 = vmatprep.subr.mxu0 0.0
    %124 = vmatpush1.msra.mxu0 %v107
    %125 = vmatprep.subr.mxu0 0.0
    %126 = vmatpush1.msra.mxu0 %v108
    %127 = vmatprep.subr.mxu0 0.0
    %128 = vmatpush1.msra.mxu0 %v109
    %129 = vmatprep.subr.mxu0 0.0
    %130 = vmatpush1.msra.mxu0 %v110
    %131 = vmatprep.subr.mxu0 0.0
    %132 = vmatpush1.msra.mxu0 %v111
    %133 = vmatprep.subr.mxu0 0.0
    %134 = vmatpush1.msra.mxu0 %v112
    %135 = vmatprep.subr.mxu0 0.0
    %136 = vmatpush1.msra.mxu0 %v113
    %137 = vmatprep.subr.mxu0 0.0
    %138 = vmatpush1.msra.mxu0 %v114
    %139 = vmatprep.subr.mxu0 0.0
    %140 = vmatpush1.msra.mxu0 %v115
    %141 = vmatprep.subr.mxu0 0.0
    %142 = vmatpush1.msra.mxu0 %v116
    %143 = vmatprep.subr.mxu0 0.0
    %144 = vmatpush1.msra.mxu0 %v117
    %145 = vmatprep.subr.mxu0 0.0
    %146 = vmatpush1.msra.mxu0 %v118
    %147 = vmatprep.subr.mxu0 0.0
    %148 = vmatpush1.msra.mxu0 %v119
    %149 = vmatprep.subr.mxu0 0.0
    %150 = vmatpush1.msra.mxu0 %v120
    %151 = vmatprep.subr.mxu0 0.0
    %152 = vmatpush1.msra.mxu0 %v121
    %153 = vmatprep.subr.mxu0 0.0
    %154 = vmatpush1.msra.mxu0 %v122
    %155 = vmatprep.subr.mxu0 0.0
    %156 = vmatpush1.msra.mxu0 0.0
    %157 = vmatprep.subr.mxu0 0.0
    %158 = vmatpush1.msra.mxu0 0.0
    %159 = vmatprep.subr.mxu0 0.0
    %160 = vmatpush1.msra.mxu0 0.0
    %161 = vmatprep.subr.mxu0 0.0
    %162 = vmatpush1.msra.mxu0 0.0
    %163 = vmatprep.subr.mxu0 0.0
    %164 = vmatpush1.msra.mxu0 0.0
    %165 = vmatprep.subr.mxu0 0.0
    %166 = vmatpush1.msra.mxu0 0.0
    %167 = vmatprep.subr.mxu0 0.0
    %168 = vmatpush1.msra.mxu0 0.0
    %169 = vmatprep.subr.mxu0 0.0
    %170 = vmatpush1.msra.mxu0 0.0
    %171 = vmatprep.subr.mxu0 0.0
    %172 = vmatpush1.msra.mxu0 0.0
    %173 = vmatprep.subr.mxu0 0.0
    %174 = vmatpush1.msra.mxu0 0.0
    %175 = vmatprep.subr.mxu0 0.0
    %176 = vmatpush1.msra.mxu0 0.0
    %177 = vmatprep.subr.mxu0 0.0
    %178 = vmatpush1.msra.mxu0 0.0
    %179 = vmatprep.subr.mxu0 0.0
    %180 = vmatpush1.msra.mxu0 0.0
    %181 = vmatprep.subr.mxu0 0.0
    %182 = vmatpush1.msra.mxu0 0.0
    %183 = vmatprep.subr.mxu0 0.0
    %184 = vmatpush1.msra.mxu0 0.0
    %185 = vmatprep.subr.mxu0 0.0
    %186 = vmatpush1.msra.mxu0 0.0
    %187 = vmatprep.mubr.f32.mxu0 0.0
    %188 = vmatmul.mubr.f32.gmra.mrb[0].mxu0 %v43
    %v189 = vpop.f32.mrb[0].mxu0
    %v190 = vadd.f32 0.0, %v189
    %v191 = vpop.f32.mrb[0].mxu0
    %192 = vmatprep.mubr.f32.mxu0 0.0
    %193 = vmatmul.mubr.f32.gmra.mrb[0].mxu0 %v44
    %v194 = vpop.f32.mrb[0].mxu0
    %v195 = vadd.f32 0.0, %v194
    %v196 = vpop.f32.mrb[0].mxu0
    %197 = vmatprep.mubr.f32.mxu0 0.0
    %198 = vmatmul.mubr.f32.gmra.mrb[0].mxu0 %v45
    %v199 = vpop.f32.mrb[0].mxu0
    %v200 = vadd.f32 0.0, %v199
    %v201 = vpop.f32.mrb[0].mxu0
    %202 = vmatprep.mubr.f32.mxu0 0.0
    %203 = vmatmul.mubr.f32.gmra.mrb[0].mxu0 %v46
    %v204 = vpop.f32.mrb[0].mxu0
    %v205 = vadd.f32 0.0, %v204
    %v206 = vpop.f32.mrb[0].mxu0
    %207 = vmatprep.mubr.f32.mxu0 0.0
    %208 = vmatmul.mubr.f32.gmra.mrb[0].mxu0 %v47
    %v209 = vpop.f32.mrb[0].mxu0
    %v210 = vadd.f32 0.0, %v209
    %v211 = vpop.f32.mrb[0].mxu0
    %212 = vmatprep.mubr.f32.mxu0 0.0
    %213 = vmatmul.mubr.f32.gmra.mrb[0].mxu0 %v48
    %v214 = vpop.f32.mrb[0].mxu0
    %v215 = vadd.f32 0.0, %v214
    %v216 = vpop.f32.mrb[0].mxu0
    %217 = vmatprep.mubr.f32.mxu0 0.0
    %218 = vmatmul.mubr.f32.gmra.mrb[0].mxu0 %v49
    %v219 = vpop.f32.mrb[0].mxu0
    %v220 = vadd.f32 0.0, %v219
    %v221 = vpop.f32.mrb[0].mxu0
    %222 = vmatprep.mubr.f32.mxu0 0.0
    %223 = vmatmul.mubr.f32.gmra.mrb[0].mxu0 %v50
    %v224 = vpop.f32.mrb[0].mxu0
    %v225 = vadd.f32 0.0, %v224
    %v226 = vpop.f32.mrb[0].mxu0
    %227 = vmatprep.mubr.f32.mxu0 0.0
    %228 = vmatmul.mubr.f32.gmra.mrb[0].mxu0 %v51
    %v229 = vpop.f32.mrb[0].mxu0
    %v230 = vadd.f32 0.0, %v229
    %v231 = vpop.f32.mrb[0].mxu0
    %232 = vmatprep.mubr.f32.mxu0 0.0
    %233 = vmatmul.mubr.f32.gmra.mrb[0].mxu0 %v52
    %v234 = vpop.f32.mrb[0].mxu0
    %v235 = vadd.f32 0.0, %v234
    %v236 = vpop.f32.mrb[0].mxu0
    %237 = vmatprep.mubr.f32.mxu0 0.0
    %238 = vmatmul.mubr.f32.gmra.mrb[0].mxu0 %v53
    %v239 = vpop.f32.mrb[0].mxu0
    %v240 = vadd.f32 0.0, %v239
    %v241 = vpop.f32.mrb[0].mxu0
    %242 = vmatprep.mubr.f32.mxu0 0.0
    %243 = vmatmul.mubr.f32.gmra.mrb[0].mxu0 %v54
    %v244 = vpop.f32.mrb[0].mxu0
    %v245 = vadd.f32 0.0, %v244
    %v246 = vpop.f32.mrb[0].mxu0
    %247 = vmatprep.mubr.f32.mxu0 0.0
    %248 = vmatmul.mubr.f32.gmra.mrb[0].mxu0 %v55
    %v249 = vpop.f32.mrb[0].mxu0
    %v250 = vadd.f32 0.0, %v249
    %v251 = vpop.f32.mrb[0].mxu0
    %252 = vmatprep.mubr.f32.mxu0 0.0
    %253 = vmatmul.mubr.f32.gmra.mrb[0].mxu0 %v56
    %v254 = vpop.f32.mrb[0].mxu0
    %v255 = vadd.f32 0.0, %v254
    %v256 = vpop.f32.mrb[0].mxu0
    %257 = vmatprep.mubr.f32.mxu0 0.0
    %258 = vmatmul.mubr.f32.gmra.mrb[0].mxu0 %v57
    %v259 = vpop.f32.mrb[0].mxu0
    %v260 = vadd.f32 0.0, %v259
    %v261 = vpop.f32.mrb[0].mxu0
    %262 = vmatprep.mubr.f32.mxu0 0.0
    %263 = vmatmul.mubr.f32.gmra.mrb[0].mxu0 %v58
    %v264 = vpop.f32.mrb[0].mxu0
    %v265 = vadd.f32 0.0, %v264
    %v266 = vpop.f32.mrb[0].mxu0
    %267 = vmatprep.mubr.f32.mxu0 0.0
    %268 = vmatmul.mubr.f32.gmra.mrb[0].mxu0 %v59
    %v269 = vpop.f32.mrb[0].mxu0
    %v270 = vadd.f32 0.0, %v269
    %v271 = vpop.f32.mrb[0].mxu0
    %272 = vmatprep.mubr.f32.mxu0 0.0
    %273 = vmatmul.mubr.f32.gmra.mrb[0].mxu0 %v60
    %v274 = vpop.f32.mrb[0].mxu0
    %v275 = vadd.f32 0.0, %v274
    %v276 = vpop.f32.mrb[0].mxu0
    %277 = vmatprep.mubr.f32.mxu0 0.0
    %278 = vmatmul.mubr.f32.gmra.mrb[0].mxu0 %v61
    %v279 = vpop.f32.mrb[0].mxu0
    %v280 = vadd.f32 0.0, %v279
    %v281 = vpop.f32.mrb[0].mxu0
    %282 = vmatprep.mubr.f32.mxu0 0.0
    %283 = vmatmul.mubr.f32.gmra.mrb[0].mxu0 %v62
    %v284 = vpop.f32.mrb[0].mxu0
    %v285 = vadd.f32 0.0, %v284
    %v286 = vpop.f32.mrb[0].mxu0
    %287 = vmatprep.mubr.f32.mxu0 0.0
    %288 = vmatmul.mubr.f32.gmra.mrb[0].mxu0 %v63
    %v289 = vpop.f32.mrb[0].mxu0
    %v290 = vadd.f32 0.0, %v289
    %v291 = vpop.f32.mrb[0].mxu0
    %292 = vmatprep.mubr.f32.mxu0 0.0
    %293 = vmatmul.mubr.f32.gmra.mrb[0].mxu0 %v64
    %v294 = vpop.f32.mrb[0].mxu0
    %v295 = vadd.f32 0.0, %v294
    %v296 = vpop.f32.mrb[0].mxu0
    %297 = vmatprep.mubr.f32.mxu0 0.0
    %298 = vmatmul.mubr.f32.gmra.mrb[0].mxu0 %v65
    %v299 = vpop.f32.mrb[0].mxu0
    %v300 = vadd.f32 0.0, %v299
    %v301 = vpop.f32.mrb[0].mxu0
    %302 = vmatprep.mubr.f32.mxu0 0.0
    %303 = vmatmul.mubr.f32.gmra.mrb[0].mxu0 %v66
    %v304 = vpop.f32.mrb[0].mxu0
    %v305 = vadd.f32 0.0, %v304
    %v306 = vpop.f32.mrb[0].mxu0
    %307 = vmatprep.mubr.f32.mxu0 0.0
    %308 = vmatmul.mubr.f32.gmra.mrb[0].mxu0 %v67
    %v309 = vpop.f32.mrb[0].mxu0
    %v310 = vadd.f32 0.0, %v309
    %v311 = vpop.f32.mrb[0].mxu0
    %312 = vmatprep.mubr.f32.mxu0 0.0
    %313 = vmatmul.mubr.f32.gmra.mrb[0].mxu0 %v68
    %v314 = vpop.f32.mrb[0].mxu0
    %v315 = vadd.f32 0.0, %v314
    %v316 = vpop.f32.mrb[0].mxu0
    %317 = vmatprep.mubr.f32.mxu0 0.0
    %318 = vmatmul.mubr.f32.gmra.mrb[0].mxu0 %v69
    %v319 = vpop.f32.mrb[0].mxu0
    %v320 = vadd.f32 0.0, %v319
    %v321 = vpop.f32.mrb[0].mxu0
    %322 = vmatprep.mubr.f32.mxu0 0.0
    %323 = vmatmul.mubr.f32.gmra.mrb[0].mxu0 %v70
    %v324 = vpop.f32.mrb[0].mxu0
    %v325 = vadd.f32 0.0, %v324
    %v326 = vpop.f32.mrb[0].mxu0
    %327 = vmatprep.mubr.f32.mxu0 0.0
    %328 = vmatmul.mubr.f32.gmra.mrb[0].mxu0 %v71
    %v329 = vpop.f32.mrb[0].mxu0
    %v330 = vadd.f32 0.0, %v329
    %v331 = vpop.f32.mrb[0].mxu0
    %332 = vmatprep.mubr.f32.mxu0 0.0
    %333 = vmatmul.mubr.f32.gmra.mrb[0].mxu0 %v72
    %v334 = vpop.f32.mrb[0].mxu0
    %v335 = vadd.f32 0.0, %v334
    %v336 = vpop.f32.mrb[0].mxu0
    %337 = vmatprep.mubr.f32.mxu0 0.0
    %338 = vmatmul.mubr.f32.gmra.mrb[0].mxu0 %v73
    %v339 = vpop.f32.mrb[0].mxu0
    %v340 = vadd.f32 0.0, %v339
    %v341 = vpop.f32.mrb[0].mxu0
    %342 = vmatprep.mubr.f32.mxu0 0.0
    %343 = vmatmul.mubr.f32.gmra.mrb[0].mxu0 %v74
    %v344 = vpop.f32.mrb[0].mxu0
    %v345 = vadd.f32 0.0, %v344
    %v346 = vpop.f32.mrb[0].mxu0
    %347 = vmatprep.mubr.f32.mxu0 0.0
    %348 = vmatmul.mubr.f32.gmra.mrb[0].mxu0 %v75
    %v349 = vpop.f32.mrb[0].mxu0
    %v350 = vadd.f32 0.0, %v349
    %v351 = vpop.f32.mrb[0].mxu0
    %352 = vmatprep.mubr.f32.mxu0 0.0
    %353 = vmatmul.mubr.f32.gmra.mrb[0].mxu0 %v76
    %v354 = vpop.f32.mrb[0].mxu0
    %v355 = vadd.f32 0.0, %v354
    %v356 = vpop.f32.mrb[0].mxu0
    %357 = vmatprep.mubr.f32.mxu0 0.0
    %358 = vmatmul.mubr.f32.gmra.mrb[0].mxu0 %v77
    %v359 = vpop.f32.mrb[0].mxu0
    %v360 = vadd.f32 0.0, %v359
    %v361 = vpop.f32.mrb[0].mxu0
    %362 = vmatprep.mubr.f32.mxu0 0.0
    %363 = vmatmul.mubr.f32.gmra.mrb[0].mxu0 %v78
    %v364 = vpop.f32.mrb[0].mxu0
    %v365 = vadd.f32 0.0, %v364
    %v366 = vpop.f32.mrb[0].mxu0
    %367 = vmatprep.mubr.f32.mxu0 0.0
    %368 = vmatmul.mubr.f32.gmra.mrb[0].mxu0 %v79
    %v369 = vpop.f32.mrb[0].mxu0
    %v370 = vadd.f32 0.0, %v369
    %v371 = vpop.f32.mrb[0].mxu0
    %372 = vmatprep.mubr.f32.mxu0 0.0
    %373 = vmatmul.mubr.f32.gmra.mrb[0].mxu0 %v80
    %v374 = vpop.f32.mrb[0].mxu0
    %v375 = vadd.f32 0.0, %v374
    %v376 = vpop.f32.mrb[0].mxu0
    %377 = vmatprep.mubr.f32.mxu0 0.0
    %378 = vmatmul.mubr.f32.gmra.mrb[0].mxu0 %v81
    %v379 = vpop.f32.mrb[0].mxu0
    %v380 = vadd.f32 0.0, %v379
    %v381 = vpop.f32.mrb[0].mxu0
    %382 = vmatprep.mubr.f32.mxu0 0.0
    %383 = vmatmul.mubr.f32.gmra.mrb[0].mxu0 %v82
    %v384 = vpop.f32.mrb[0].mxu0
    %v385 = vadd.f32 0.0, %v384
    %v386 = vpop.f32.mrb[0].mxu0
    %387 = vmatprep.mubr.f32.mxu0 0.0
    %388 = vmatmul.mubr.f32.gmra.mrb[0].mxu0 %v83
    %v389 = vpop.f32.mrb[0].mxu0
    %v390 = vadd.f32 0.0, %v389
    %v391 = vpop.f32.mrb[0].mxu0
    %392 = vmatprep.mubr.f32.mxu0 0.0
    %393 = vmatmul.mubr.f32.gmra.mrb[0].mxu0 %v84
    %v394 = vpop.f32.mrb[0].mxu0
    %v395 = vadd.f32 0.0, %v394
    %v396 = vpop.f32.mrb[0].mxu0
    %397 = vmatprep.mubr.f32.mxu0 0.0
    %398 = vmatmul.mubr.f32.gmra.mrb[0].mxu0 %v85
    %v399 = vpop.f32.mrb[0].mxu0
    %v400 = vadd.f32 0.0, %v399
    %v401 = vpop.f32.mrb[0].mxu0
    %402 = vmatprep.mubr.f32.mxu0 0.0
    %403 = vmatmul.mubr.f32.gmra.mrb[0].mxu0 %v86
    %v404 = vpop.f32.mrb[0].mxu0
    %v405 = vadd.f32 0.0, %v404
    %v406 = vpop.f32.mrb[0].mxu0
    %407 = vmatprep.mubr.f32.mxu0 0.0
    %408 = vmatmul.mubr.f32.gmra.mrb[0].mxu0 %v87
    %v409 = vpop.f32.mrb[0].mxu0
    %v410 = vadd.f32 0.0, %v409
    %v411 = vpop.f32.mrb[0].mxu0
    %412 = vmatprep.mubr.f32.mxu0 0.0
    %413 = vmatmul.mubr.f32.gmra.mrb[0].mxu0 %v88
    %v414 = vpop.f32.mrb[0].mxu0
    %v415 = vadd.f32 0.0, %v414
    %v416 = vpop.f32.mrb[0].mxu0
    %417 = vmatprep.mubr.f32.mxu0 0.0
    %418 = vmatmul.mubr.f32.gmra.mrb[0].mxu0 %v89
    %v419 = vpop.f32.mrb[0].mxu0
    %v420 = vadd.f32 0.0, %v419
    %v421 = vpop.f32.mrb[0].mxu0
    %422 = vmatprep.mubr.f32.mxu0 0.0
    %423 = vmatmul.mubr.f32.gmra.mrb[0].mxu0 %v90
    %v424 = vpop.f32.mrb[0].mxu0
    %v425 = vadd.f32 0.0, %v424
    %v426 = vpop.f32.mrb[0].mxu0
    %427 = vmatprep.mubr.f32.mxu0 0.0
    %428 = vmatmul.mubr.f32.gmra.mrb[0].mxu0 %v91
    %v429 = vpop.f32.mrb[0].mxu0
    %v430 = vadd.f32 0.0, %v429
    %v431 = vpop.f32.mrb[0].mxu0
    %432 = vmatprep.mubr.f32.mxu0 0.0
    %433 = vmatmul.mubr.f32.gmra.mrb[0].mxu0 %v92
    %v434 = vpop.f32.mrb[0].mxu0
    %v435 = vadd.f32 0.0, %v434
    %v436 = vpop.f32.mrb[0].mxu0
    %437 = vmatprep.mubr.f32.mxu0 0.0
    %438 = vmatmul.mubr.f32.gmra.mrb[0].mxu0 %v93
    %v439 = vpop.f32.mrb[0].mxu0
    %v440 = vadd.f32 0.0, %v439
    %v441 = vpop.f32.mrb[0].mxu0
    %442 = vmatprep.mubr.f32.mxu0 0.0
    %443 = vmatmul.mubr.f32.gmra.mrb[0].mxu0 %v94
    %v444 = vpop.f32.mrb[0].mxu0
    %v445 = vadd.f32 0.0, %v444
    %v446 = vpop.f32.mrb[0].mxu0
    %447 = vmatprep.mubr.f32.mxu0 0.0
    %448 = vmatmul.mubr.f32.gmra.mrb[0].mxu0 %v95
    %v449 = vpop.f32.mrb[0].mxu0
    %v450 = vadd.f32 0.0, %v449
    %v451 = vpop.f32.mrb[0].mxu0
    %452 = vmatprep.mubr.f32.mxu0 0.0
    %453 = vmatmul.mubr.f32.gmra.mrb[0].mxu0 %v96
    %v454 = vpop.f32.mrb[0].mxu0
    %v455 = vadd.f32 0.0, %v454
    %v456 = vpop.f32.mrb[0].mxu0
    %457 = vmatprep.mubr.f32.mxu0 0.0
    %458 = vmatmul.mubr.f32.gmra.mrb[0].mxu0 %v97
    %v459 = vpop.f32.mrb[0].mxu0
    %v460 = vadd.f32 0.0, %v459
    %v461 = vpop.f32.mrb[0].mxu0
    %462 = vmatprep.mubr.f32.mxu0 0.0
    %463 = vmatmul.mubr.f32.gmra.mrb[0].mxu0 %v98
    %v464 = vpop.f32.mrb[0].mxu0
    %v465 = vadd.f32 0.0, %v464
    %v466 = vpop.f32.mrb[0].mxu0
    %467 = vmatprep.mubr.f32.mxu0 0.0
    %468 = vmatmul.mubr.f32.gmra.mrb[0].mxu0 %v99
    %v469 = vpop.f32.mrb[0].mxu0
    %v470 = vadd.f32 0.0, %v469
    %v471 = vpop.f32.mrb[0].mxu0
    %472 = vmatprep.mubr.f32.mxu0 0.0
    %473 = vmatmul.mubr.f32.gmra.mrb[0].mxu0 %v100
    %v474 = vpop.f32.mrb[0].mxu0
    %v475 = vadd.f32 0.0, %v474
    %v476 = vpop.f32.mrb[0].mxu0
    %477 = vmatprep.mubr.f32.mxu0 0.0
    %478 = vmatmul.mubr.f32.gmra.mrb[0].mxu0 %v101
    %v479 = vpop.f32.mrb[0].mxu0
    %v480 = vadd.f32 0.0, %v479
    %v481 = vpop.f32.mrb[0].mxu0
    %482 = vmatprep.mubr.f32.mxu0 0.0
    %483 = vmatmul.mubr.f32.gmra.mrb[0].mxu0 %v102
    %v484 = vpop.f32.mrb[0].mxu0
    %v485 = vadd.f32 0.0, %v484
    %v486 = vpop.f32.mrb[0].mxu0
    %487 = vmatprep.mubr.f32.mxu0 0.0
    %488 = vmatmul.mubr.f32.gmra.mrb[0].mxu0 %v103
    %v489 = vpop.f32.mrb[0].mxu0
    %v490 = vadd.f32 0.0, %v489
    %v491 = vpop.f32.mrb[0].mxu0
    %492 = vmatprep.mubr.f32.mxu0 0.0
    %493 = vmatmul.mubr.f32.gmra.mrb[0].mxu0 %v104
    %v494 = vpop.f32.mrb[0].mxu0
    %v495 = vadd.f32 0.0, %v494
    %v496 = vpop.f32.mrb[0].mxu0
    %497 = vmatprep.mubr.f32.mxu0 0.0
    %498 = vmatmul.mubr.f32.gmra.mrb[0].mxu0 %v105
    %v499 = vpop.f32.mrb[0].mxu0
    %v500 = vadd.f32 0.0, %v499
    %v501 = vpop.f32.mrb[0].mxu0
    %502 = vmatprep.mubr.f32.mxu0 0.0
    %503 = vmatmul.mubr.f32.gmra.mrb[0].mxu0 %v106
    %v504 = vpop.f32.mrb[0].mxu0
    %v505 = vadd.f32 0.0, %v504
    %v506 = vpop.f32.mrb[0].mxu0
    %507 = vdwg.mxu0
    %v508 = vld [vmem:[%s2] sm:$0x1]
    %v510 = vlaneseq
    %v511 = vshrl.u32 %v510, 7
    %v512 = vsub.s32 0, %v511
    %v513 = vrot.slane %v508, %v512
    %v515 = vsub.f32 %v513, %v190
    %v516 = vsub.f32 %v513, %v195
    %v517 = vsub.f32 %v513, %v200
    %v518 = vsub.f32 %v513, %v205
    %v519 = vsub.f32 %v513, %v210
    %v520 = vsub.f32 %v513, %v215
    %v521 = vsub.f32 %v513, %v220
    %v522 = vsub.f32 %v513, %v225
    %v523 = vsub.f32 %v513, %v230
    %v524 = vsub.f32 %v513, %v235
    %v525 = vsub.f32 %v513, %v240
    %v526 = vsub.f32 %v513, %v245
    %v527 = vsub.f32 %v513, %v250
    %v528 = vsub.f32 %v513, %v255
    %v529 = vsub.f32 %v513, %v260
    %v530 = vsub.f32 %v513, %v265
    %v531 = vsub.f32 %v513, %v270
    %v532 = vsub.f32 %v513, %v275
    %v533 = vsub.f32 %v513, %v280
    %v534 = vsub.f32 %v513, %v285
    %v535 = vsub.f32 %v513, %v290
    %v536 = vsub.f32 %v513, %v295
    %v537 = vsub.f32 %v513, %v300
    %v538 = vsub.f32 %v513, %v305
    %v539 = vsub.f32 %v513, %v310
    %v540 = vsub.f32 %v513, %v315
    %v541 = vsub.f32 %v513, %v320
    %v542 = vsub.f32 %v513, %v325
    %v543 = vsub.f32 %v513, %v330
    %v544 = vsub.f32 %v513, %v335
    %v545 = vsub.f32 %v513, %v340
    %v546 = vsub.f32 %v513, %v345
    %v547 = vsub.f32 %v513, %v350
    %v548 = vsub.f32 %v513, %v355
    %v549 = vsub.f32 %v513, %v360
    %v550 = vsub.f32 %v513, %v365
    %v551 = vsub.f32 %v513, %v370
    %v552 = vsub.f32 %v513, %v375
    %v553 = vsub.f32 %v513, %v380
    %v554 = vsub.f32 %v513, %v385
    %v555 = vsub.f32 %v513, %v390
    %v556 = vsub.f32 %v513, %v395
    %v557 = vsub.f32 %v513, %v400
    %v558 = vsub.f32 %v513, %v405
    %v559 = vsub.f32 %v513, %v410
    %v560 = vsub.f32 %v513, %v415
    %v561 = vsub.f32 %v513, %v420
    %v562 = vsub.f32 %v513, %v425
    %v563 = vsub.f32 %v513, %v430
    %v564 = vsub.f32 %v513, %v435
    %v565 = vsub.f32 %v513, %v440
    %v566 = vsub.f32 %v513, %v445
    %v567 = vsub.f32 %v513, %v450
    %v568 = vsub.f32 %v513, %v455
    %v569 = vsub.f32 %v513, %v460
    %v570 = vsub.f32 %v513, %v465
    %v571 = vsub.f32 %v513, %v470
    %v572 = vsub.f32 %v513, %v475
    %v573 = vsub.f32 %v513, %v480
    %v574 = vsub.f32 %v513, %v485
    %v575 = vsub.f32 %v513, %v490
    %v576 = vsub.f32 %v513, %v495
    %v577 = vsub.f32 %v513, %v500
    %v578 = vsub.f32 %v513, %v505
    %579 = vmin.index.xlane.f32.xlu0 %v515
    %v580 = vpop.xlane.xlu0 %579
    %581 = vmin.index.xlane.f32.xlu0 %v516
    %v582 = vpop.xlane.xlu0 %581
    %583 = vmin.index.xlane.f32.xlu0 %v517
    %v584 = vpop.xlane.xlu0 %583
    %585 = vmin.index.xlane.f32.xlu0 %v518
    %v586 = vpop.xlane.xlu0 %585
    %587 = vmin.index.xlane.f32.xlu0 %v519
    %v588 = vpop.xlane.xlu0 %587
    %589 = vmin.index.xlane.f32.xlu0 %v520
    %v590 = vpop.xlane.xlu0 %589
    %591 = vmin.index.xlane.f32.xlu0 %v521
    %v592 = vpop.xlane.xlu0 %591
    %593 = vmin.index.xlane.f32.xlu0 %v522
    %v594 = vpop.xlane.xlu0 %593
    %595 = vmin.index.xlane.f32.xlu0 %v523
    %v596 = vpop.xlane.xlu0 %595
    %597 = vmin.index.xlane.f32.xlu0 %v524
    %v598 = vpop.xlane.xlu0 %597
    %599 = vmin.index.xlane.f32.xlu0 %v525
    %v600 = vpop.xlane.xlu0 %599
    %601 = vmin.index.xlane.f32.xlu0 %v526
    %v602 = vpop.xlane.xlu0 %601
    %603 = vmin.index.xlane.f32.xlu0 %v527
    %v604 = vpop.xlane.xlu0 %603
    %605 = vmin.index.xlane.f32.xlu0 %v528
    %v606 = vpop.xlane.xlu0 %605
    %607 = vmin.index.xlane.f32.xlu0 %v529
    %v608 = vpop.xlane.xlu0 %607
    %609 = vmin.index.xlane.f32.xlu0 %v530
    %v610 = vpop.xlane.xlu0 %609
    %611 = vmin.index.xlane.f32.xlu0 %v531
    %v612 = vpop.xlane.xlu0 %611
    %613 = vmin.index.xlane.f32.xlu0 %v532
    %v614 = vpop.xlane.xlu0 %613
    %615 = vmin.index.xlane.f32.xlu0 %v533
    %v616 = vpop.xlane.xlu0 %615
    %617 = vmin.index.xlane.f32.xlu0 %v534
    %v618 = vpop.xlane.xlu0 %617
    %619 = vmin.index.xlane.f32.xlu0 %v535
    %v620 = vpop.xlane.xlu0 %619
    %621 = vmin.index.xlane.f32.xlu0 %v536
    %v622 = vpop.xlane.xlu0 %621
    %623 = vmin.index.xlane.f32.xlu0 %v537
    %v624 = vpop.xlane.xlu0 %623
    %625 = vmin.index.xlane.f32.xlu0 %v538
    %v626 = vpop.xlane.xlu0 %625
    %627 = vmin.index.xlane.f32.xlu0 %v539
    %v628 = vpop.xlane.xlu0 %627
    %629 = vmin.index.xlane.f32.xlu0 %v540
    %v630 = vpop.xlane.xlu0 %629
    %631 = vmin.index.xlane.f32.xlu0 %v541
    %v632 = vpop.xlane.xlu0 %631
    %633 = vmin.index.xlane.f32.xlu0 %v542
    %v634 = vpop.xlane.xlu0 %633
    %635 = vmin.index.xlane.f32.xlu0 %v543
    %v636 = vpop.xlane.xlu0 %635
    %637 = vmin.index.xlane.f32.xlu0 %v544
    %v638 = vpop.xlane.xlu0 %637
    %639 = vmin.index.xlane.f32.xlu0 %v545
    %v640 = vpop.xlane.xlu0 %639
    %641 = vmin.index.xlane.f32.xlu0 %v546
    %v642 = vpop.xlane.xlu0 %641
    %643 = vmin.index.xlane.f32.xlu0 %v547
    %v644 = vpop.xlane.xlu0 %643
    %645 = vmin.index.xlane.f32.xlu0 %v548
    %v646 = vpop.xlane.xlu0 %645
    %647 = vmin.index.xlane.f32.xlu0 %v549
    %v648 = vpop.xlane.xlu0 %647
    %649 = vmin.index.xlane.f32.xlu0 %v550
    %v650 = vpop.xlane.xlu0 %649
    %651 = vmin.index.xlane.f32.xlu0 %v551
    %v652 = vpop.xlane.xlu0 %651
    %653 = vmin.index.xlane.f32.xlu0 %v552
    %v654 = vpop.xlane.xlu0 %653
    %655 = vmin.index.xlane.f32.xlu0 %v553
    %v656 = vpop.xlane.xlu0 %655
    %657 = vmin.index.xlane.f32.xlu0 %v554
    %v658 = vpop.xlane.xlu0 %657
    %659 = vmin.index.xlane.f32.xlu0 %v555
    %v660 = vpop.xlane.xlu0 %659
    %661 = vmin.index.xlane.f32.xlu0 %v556
    %v662 = vpop.xlane.xlu0 %661
    %663 = vmin.index.xlane.f32.xlu0 %v557
    %v664 = vpop.xlane.xlu0 %663
    %665 = vmin.index.xlane.f32.xlu0 %v558
    %v666 = vpop.xlane.xlu0 %665
    %667 = vmin.index.xlane.f32.xlu0 %v559
    %v668 = vpop.xlane.xlu0 %667
    %669 = vmin.index.xlane.f32.xlu0 %v560
    %v670 = vpop.xlane.xlu0 %669
    %671 = vmin.index.xlane.f32.xlu0 %v561
    %v672 = vpop.xlane.xlu0 %671
    %673 = vmin.index.xlane.f32.xlu0 %v562
    %v674 = vpop.xlane.xlu0 %673
    %675 = vmin.index.xlane.f32.xlu0 %v563
    %v676 = vpop.xlane.xlu0 %675
    %677 = vmin.index.xlane.f32.xlu0 %v564
    %v678 = vpop.xlane.xlu0 %677
    %679 = vmin.index.xlane.f32.xlu0 %v565
    %v680 = vpop.xlane.xlu0 %679
    %681 = vmin.index.xlane.f32.xlu0 %v566
    %v682 = vpop.xlane.xlu0 %681
    %683 = vmin.index.xlane.f32.xlu0 %v567
    %v684 = vpop.xlane.xlu0 %683
    %685 = vmin.index.xlane.f32.xlu0 %v568
    %v686 = vpop.xlane.xlu0 %685
    %687 = vmin.index.xlane.f32.xlu0 %v569
    %v688 = vpop.xlane.xlu0 %687
    %689 = vmin.index.xlane.f32.xlu0 %v570
    %v690 = vpop.xlane.xlu0 %689
    %691 = vmin.index.xlane.f32.xlu0 %v571
    %v692 = vpop.xlane.xlu0 %691
    %693 = vmin.index.xlane.f32.xlu0 %v572
    %v694 = vpop.xlane.xlu0 %693
    %695 = vmin.index.xlane.f32.xlu0 %v573
    %v696 = vpop.xlane.xlu0 %695
    %697 = vmin.index.xlane.f32.xlu0 %v574
    %v698 = vpop.xlane.xlu0 %697
    %699 = vmin.index.xlane.f32.xlu0 %v575
    %v700 = vpop.xlane.xlu0 %699
    %701 = vmin.index.xlane.f32.xlu0 %v576
    %v702 = vpop.xlane.xlu0 %701
    %703 = vmin.index.xlane.f32.xlu0 %v577
    %v704 = vpop.xlane.xlu0 %703
    %705 = vmin.index.xlane.f32.xlu0 %v578
    %v706 = vpop.xlane.xlu0 %705
    %v707 = vlaneseq
    %v708 = vand.u32 %v707, 127
    %v709 = vlaneseq
    %v710 = vshrl.u32 %v709, 7
    %v711 = vsub.s32 %v708, %v710
    %v712 = vrot.slane %v580, %v711
    %v713 = vadd.s32 %v708, 4294967288
    %v714 = vlaneseq
    %v715 = vshrl.u32 %v714, 7
    %v716 = vsub.s32 %v713, %v715
    %v717 = vrot.slane %v582, %v716
    %vm718 = vcmask 130112
    %v719 = vsel %vm718, %v717, %v712
    %v720 = vadd.s32 %v708, 4294967280
    %v721 = vlaneseq
    %v722 = vshrl.u32 %v721, 7
    %v723 = vsub.s32 %v720, %v722
    %v724 = vrot.slane %v584, %v723
    %vm725 = vcmask 195712
    %v726 = vsel %vm725, %v724, %v719
    %v727 = vadd.s32 %v708, 4294967272
    %v728 = vlaneseq
    %v729 = vshrl.u32 %v728, 7
    %v730 = vsub.s32 %v727, %v729
    %v731 = vrot.slane %v586, %v730
    %vm732 = vcmask 261312
    %v733 = vsel %vm732, %v731, %v726
    %v734 = vadd.s32 %v708, 4294967264
    %v735 = vlaneseq
    %v736 = vshrl.u32 %v735, 7
    %v737 = vsub.s32 %v734, %v736
    %v738 = vrot.slane %v588, %v737
    %vm739 = vcmask 326912
    %v740 = vsel %vm739, %v738, %v733
    %v741 = vadd.s32 %v708, 4294967256
    %v742 = vlaneseq
    %v743 = vshrl.u32 %v742, 7
    %v744 = vsub.s32 %v741, %v743
    %v745 = vrot.slane %v590, %v744
    %vm746 = vcmask 392512
    %v747 = vsel %vm746, %v745, %v740
    %v748 = vadd.s32 %v708, 4294967248
    %v749 = vlaneseq
    %v750 = vshrl.u32 %v749, 7
    %v751 = vsub.s32 %v748, %v750
    %v752 = vrot.slane %v592, %v751
    %vm753 = vcmask 458112
    %v754 = vsel %vm753, %v752, %v747
    %v755 = vadd.s32 %v708, 4294967240
    %v756 = vlaneseq
    %v757 = vshrl.u32 %v756, 7
    %v758 = vsub.s32 %v755, %v757
    %v759 = vrot.slane %v594, %v758
    %vm760 = vcmask 523712
    %v761 = vsel %vm760, %v759, %v754
    %v762 = vadd.s32 %v708, 4294967232
    %v763 = vlaneseq
    %v764 = vshrl.u32 %v763, 7
    %v765 = vsub.s32 %v762, %v764
    %v766 = vrot.slane %v596, %v765
    %vm767 = vcmask 589312
    %v768 = vsel %vm767, %v766, %v761
    %v769 = vadd.s32 %v708, 4294967224
    %v770 = vlaneseq
    %v771 = vshrl.u32 %v770, 7
    %v772 = vsub.s32 %v769, %v771
    %v773 = vrot.slane %v598, %v772
    %vm774 = vcmask 654912
    %v775 = vsel %vm774, %v773, %v768
    %v776 = vadd.s32 %v708, 4294967216
    %v777 = vlaneseq
    %v778 = vshrl.u32 %v777, 7
    %v779 = vsub.s32 %v776, %v778
    %v780 = vrot.slane %v600, %v779
    %vm781 = vcmask 720512
    %v782 = vsel %vm781, %v780, %v775
    %v783 = vadd.s32 %v708, 4294967208
    %v784 = vlaneseq
    %v785 = vshrl.u32 %v784, 7
    %v786 = vsub.s32 %v783, %v785
    %v787 = vrot.slane %v602, %v786
    %vm788 = vcmask 786112
    %v789 = vsel %vm788, %v787, %v782
    %v790 = vadd.s32 %v708, 4294967200
    %v791 = vlaneseq
    %v792 = vshrl.u32 %v791, 7
    %v793 = vsub.s32 %v790, %v792
    %v794 = vrot.slane %v604, %v793
    %vm795 = vcmask 851712
    %v796 = vsel %vm795, %v794, %v789
    %v797 = vadd.s32 %v708, 4294967192
    %v798 = vlaneseq
    %v799 = vshrl.u32 %v798, 7
    %v800 = vsub.s32 %v797, %v799
    %v801 = vrot.slane %v606, %v800
    %vm802 = vcmask 917312
    %v803 = vsel %vm802, %v801, %v796
    %v804 = vadd.s32 %v708, 4294967184
    %v805 = vlaneseq
    %v806 = vshrl.u32 %v805, 7
    %v807 = vsub.s32 %v804, %v806
    %v808 = vrot.slane %v608, %v807
    %vm809 = vcmask 982912
    %v810 = vsel %vm809, %v808, %v803
    %v811 = vadd.s32 %v708, 4294967176
    %v812 = vlaneseq
    %v813 = vshrl.u32 %v812, 7
    %v814 = vsub.s32 %v811, %v813
    %v815 = vrot.slane %v610, %v814
    %vm816 = vcmask 1048512
    %v817 = vsel %vm816, %v815, %v810
    %818 = vst [vmem:[#allocation7] ss:$4 sm:$0x1] %v817
    %v819 = vlaneseq
    %v820 = vshrl.u32 %v819, 7
    %v821 = vsub.s32 %v708, %v820
    %v822 = vrot.slane %v612, %v821
    %v823 = vlaneseq
    %v824 = vshrl.u32 %v823, 7
    %v825 = vsub.s32 %v713, %v824
    %v826 = vrot.slane %v614, %v825
    %v827 = vsel %vm718, %v826, %v822
    %v828 = vlaneseq
    %v829 = vshrl.u32 %v828, 7
    %v830 = vsub.s32 %v720, %v829
    %v831 = vrot.slane %v616, %v830
    %v832 = vsel %vm725, %v831, %v827
    %v833 = vlaneseq
    %v834 = vshrl.u32 %v833, 7
    %v835 = vsub.s32 %v727, %v834
    %v836 = vrot.slane %v618, %v835
    %v837 = vsel %vm732, %v836, %v832
    %v838 = vlaneseq
    %v839 = vshrl.u32 %v838, 7
    %v840 = vsub.s32 %v734, %v839
    %v841 = vrot.slane %v620, %v840
    %v842 = vsel %vm739, %v841, %v837
    %v843 = vlaneseq
    %v844 = vshrl.u32 %v843, 7
    %v845 = vsub.s32 %v741, %v844
    %v846 = vrot.slane %v622, %v845
    %v847 = vsel %vm746, %v846, %v842
    %v848 = vlaneseq
    %v849 = vshrl.u32 %v848, 7
    %v850 = vsub.s32 %v748, %v849
    %v851 = vrot.slane %v624, %v850
    %v852 = vsel %vm753, %v851, %v847
    %v853 = vlaneseq
    %v854 = vshrl.u32 %v853, 7
    %v855 = vsub.s32 %v755, %v854
    %v856 = vrot.slane %v626, %v855
    %v857 = vsel %vm760, %v856, %v852
    %v858 = vlaneseq
    %v859 = vshrl.u32 %v858, 7
    %v860 = vsub.s32 %v762, %v859
    %v861 = vrot.slane %v628, %v860
    %v862 = vsel %vm767, %v861, %v857
    %v863 = vlaneseq
    %v864 = vshrl.u32 %v863, 7
    %v865 = vsub.s32 %v769, %v864
    %v866 = vrot.slane %v630, %v865
    %v867 = vsel %vm774, %v866, %v862
    %v868 = vlaneseq
    %v869 = vshrl.u32 %v868, 7
    %v870 = vsub.s32 %v776, %v869
    %v871 = vrot.slane %v632, %v870
    %v872 = vsel %vm781, %v871, %v867
    %v873 = vlaneseq
    %v874 = vshrl.u32 %v873, 7
    %v875 = vsub.s32 %v783, %v874
    %v876 = vrot.slane %v634, %v875
    %v877 = vsel %vm788, %v876, %v872
    %v878 = vlaneseq
    %v879 = vshrl.u32 %v878, 7
    %v880 = vsub.s32 %v790, %v879
    %v881 = vrot.slane %v636, %v880
    %v882 = vsel %vm795, %v881, %v877
    %v883 = vlaneseq
    %v884 = vshrl.u32 %v883, 7
    %v885 = vsub.s32 %v797, %v884
    %v886 = vrot.slane %v638, %v885
    %v887 = vsel %vm802, %v886, %v882
    %v888 = vlaneseq
    %v889 = vshrl.u32 %v888, 7
    %v890 = vsub.s32 %v804, %v889
    %v891 = vrot.slane %v640, %v890
    %v892 = vsel %vm809, %v891, %v887
    %v893 = vlaneseq
    %v894 = vshrl.u32 %v893, 7
    %v895 = vsub.s32 %v811, %v894
    %v896 = vrot.slane %v642, %v895
    %v897 = vsel %vm816, %v896, %v892
    %s898 = scalar_lea.vmem [#allocation7], 1
    %899 = vst [vmem:[%s898] ss:$4 sm:$0x1] %v897
    %v900 = vlaneseq
    %v901 = vshrl.u32 %v900, 7
    %v902 = vsub.s32 %v708, %v901
    %v903 = vrot.slane %v644, %v902
    %v904 = vlaneseq
    %v905 = vshrl.u32 %v904, 7
    %v906 = vsub.s32 %v713, %v905
    %v907 = vrot.slane %v646, %v906
    %v908 = vsel %vm718, %v907, %v903
    %v909 = vlaneseq
    %v910 = vshrl.u32 %v909, 7
    %v911 = vsub.s32 %v720, %v910
    %v912 = vrot.slane %v648, %v911
    %v913 = vsel %vm725, %v912, %v908
    %v914 = vlaneseq
    %v915 = vshrl.u32 %v914, 7
    %v916 = vsub.s32 %v727, %v915
    %v917 = vrot.slane %v650, %v916
    %v918 = vsel %vm732, %v917, %v913
    %v919 = vlaneseq
    %v920 = vshrl.u32 %v919, 7
    %v921 = vsub.s32 %v734, %v920
    %v922 = vrot.slane %v652, %v921
    %v923 = vsel %vm739, %v922, %v918
    %v924 = vlaneseq
    %v925 = vshrl.u32 %v924, 7
    %v926 = vsub.s32 %v741, %v925
    %v927 = vrot.slane %v654, %v926
    %v928 = vsel %vm746, %v927, %v923
    %v929 = vlaneseq
    %v930 = vshrl.u32 %v929, 7
    %v931 = vsub.s32 %v748, %v930
    %v932 = vrot.slane %v656, %v931
    %v933 = vsel %vm753, %v932, %v928
    %v934 = vlaneseq
    %v935 = vshrl.u32 %v934, 7
    %v936 = vsub.s32 %v755, %v935
    %v937 = vrot.slane %v658, %v936
    %v938 = vsel %vm760, %v937, %v933
    %v939 = vlaneseq
    %v940 = vshrl.u32 %v939, 7
    %v941 = vsub.s32 %v762, %v940
    %v942 = vrot.slane %v660, %v941
    %v943 = vsel %vm767, %v942, %v938
    %v944 = vlaneseq
    %v945 = vshrl.u32 %v944, 7
    %v946 = vsub.s32 %v769, %v945
    %v947 = vrot.slane %v662, %v946
    %v948 = vsel %vm774, %v947, %v943
    %v949 = vlaneseq
    %v950 = vshrl.u32 %v949, 7
    %v951 = vsub.s32 %v776, %v950
    %v952 = vrot.slane %v664, %v951
    %v953 = vsel %vm781, %v952, %v948
    %v954 = vlaneseq
    %v955 = vshrl.u32 %v954, 7
    %v956 = vsub.s32 %v783, %v955
    %v957 = vrot.slane %v666, %v956
    %v958 = vsel %vm788, %v957, %v953
    %v959 = vlaneseq
    %v960 = vshrl.u32 %v959, 7
    %v961 = vsub.s32 %v790, %v960
    %v962 = vrot.slane %v668, %v961
    %v963 = vsel %vm795, %v962, %v958
    %v964 = vlaneseq
    %v965 = vshrl.u32 %v964, 7
    %v966 = vsub.s32 %v797, %v965
    %v967 = vrot.slane %v670, %v966
    %v968 = vsel %vm802, %v967, %v963
    %v969 = vlaneseq
    %v970 = vshrl.u32 %v969, 7
    %v971 = vsub.s32 %v804, %v970
    %v972 = vrot.slane %v672, %v971
    %v973 = vsel %vm809, %v972, %v968
    %v974 = vlaneseq
    %v975 = vshrl.u32 %v974, 7
    %v976 = vsub.s32 %v811, %v975
    %v977 = vrot.slane %v674, %v976
    %v978 = vsel %vm816, %v977, %v973
    %s979 = scalar_lea.vmem [#allocation7], 2
    %980 = vst [vmem:[%s979] ss:$4 sm:$0x1] %v978
    %v981 = vlaneseq
    %v982 = vshrl.u32 %v981, 7
    %v983 = vsub.s32 %v708, %v982
    %v984 = vrot.slane %v676, %v983
    %v985 = vlaneseq
    %v986 = vshrl.u32 %v985, 7
    %v987 = vsub.s32 %v713, %v986
    %v988 = vrot.slane %v678, %v987
    %v989 = vsel %vm718, %v988, %v984
    %v990 = vlaneseq
    %v991 = vshrl.u32 %v990, 7
    %v992 = vsub.s32 %v720, %v991
    %v993 = vrot.slane %v680, %v992
    %v994 = vsel %vm725, %v993, %v989
    %v995 = vlaneseq
    %v996 = vshrl.u32 %v995, 7
    %v997 = vsub.s32 %v727, %v996
    %v998 = vrot.slane %v682, %v997
    %v999 = vsel %vm732, %v998, %v994
    %v1000 = vlaneseq
    %v1001 = vshrl.u32 %v1000, 7
    %v1002 = vsub.s32 %v734, %v1001
    %v1003 = vrot.slane %v684, %v1002
    %v1004 = vsel %vm739, %v1003, %v999
    %v1005 = vlaneseq
    %v1006 = vshrl.u32 %v1005, 7
    %v1007 = vsub.s32 %v741, %v1006
    %v1008 = vrot.slane %v686, %v1007
    %v1009 = vsel %vm746, %v1008, %v1004
    %v1010 = vlaneseq
    %v1011 = vshrl.u32 %v1010, 7
    %v1012 = vsub.s32 %v748, %v1011
    %v1013 = vrot.slane %v688, %v1012
    %v1014 = vsel %vm753, %v1013, %v1009
    %v1015 = vlaneseq
    %v1016 = vshrl.u32 %v1015, 7
    %v1017 = vsub.s32 %v755, %v1016
    %v1018 = vrot.slane %v690, %v1017
    %v1019 = vsel %vm760, %v1018, %v1014
    %v1020 = vlaneseq
    %v1021 = vshrl.u32 %v1020, 7
    %v1022 = vsub.s32 %v762, %v1021
    %v1023 = vrot.slane %v692, %v1022
    %v1024 = vsel %vm767, %v1023, %v1019
    %v1025 = vlaneseq
    %v1026 = vshrl.u32 %v1025, 7
    %v1027 = vsub.s32 %v769, %v1026
    %v1028 = vrot.slane %v694, %v1027
    %v1029 = vsel %vm774, %v1028, %v1024
    %v1030 = vlaneseq
    %v1031 = vshrl.u32 %v1030, 7
    %v1032 = vsub.s32 %v776, %v1031
    %v1033 = vrot.slane %v696, %v1032
    %v1034 = vsel %vm781, %v1033, %v1029
    %v1035 = vlaneseq
    %v1036 = vshrl.u32 %v1035, 7
    %v1037 = vsub.s32 %v783, %v1036
    %v1038 = vrot.slane %v698, %v1037
    %v1039 = vsel %vm788, %v1038, %v1034
    %v1040 = vlaneseq
    %v1041 = vshrl.u32 %v1040, 7
    %v1042 = vsub.s32 %v790, %v1041
    %v1043 = vrot.slane %v700, %v1042
    %v1044 = vsel %vm795, %v1043, %v1039
    %v1045 = vlaneseq
    %v1046 = vshrl.u32 %v1045, 7
    %v1047 = vsub.s32 %v797, %v1046
    %v1048 = vrot.slane %v702, %v1047
    %v1049 = vsel %vm802, %v1048, %v1044
    %v1050 = vlaneseq
    %v1051 = vshrl.u32 %v1050, 7
    %v1052 = vsub.s32 %v804, %v1051
    %v1053 = vrot.slane %v704, %v1052
    %v1054 = vsel %vm809, %v1053, %v1049
    %v1055 = vlaneseq
    %v1056 = vshrl.u32 %v1055, 7
    %v1057 = vsub.s32 %v811, %v1056
    %v1058 = vrot.slane %v706, %v1057
    %v1059 = vsel %vm816, %v1058, %v1054
    %s1060 = scalar_lea.vmem [#allocation7], 3
    %1061 = vst [vmem:[%s1060] ss:$4 sm:$0x1] %v1059
    // Predicated region
    $region22: #{tpu_custom_call.1} parent=1 // pred_check
      _
    $region23: #{tpu_custom_call.1} parent=1 // pred_check_branch
      %1063 = sbr.rel (0) target = $region25
    $region24: #{tpu_custom_call.1} parent=1 // pred_region
      %s1065 = ssub.s32 64, 64
      %1066 = vsyncadd [#allocation4], %s1065
      %s1068 = sshll.u32 [#allocation7], 4
      %s1069 = int_to_ptr.vmem [resolvable:$true] %s1068
      %1071 = dma.vmem_to_hbm [thread:$0]  %s1069, 64, %s3, [#allocation4]
    $region25: #{tpu_custom_call.1} parent=1 // pred_fallthru
      _
    // Predicated region
    $region26: #{tpu_custom_call.1} parent=1 // pred_check
      _
    $region27: #{tpu_custom_call.1} parent=1 // pred_check_branch
      %1073 = sbr.rel (0) target = $region29
    $region28: #{tpu_custom_call.1} parent=1 // pred_region
      %1074 = dma.done [#allocation4], 64
    $region29: #{tpu_custom_call.1} parent=1 // pred_fallthru
      _
    %1075 = vsyncpa [#allocation3], 1
    %1076 = vsyncpa [#allocation6], 1
    %1077 = vsyncpa [#allocation4], 1

</llo_original>
